<compile_context>
chip_gen: v7x
topology: tpu7x:2x2x1
jax: 0.10.0
libtpu: 0.0.40
codegen_flags: <defaults>
</compile_context>

<pallas_src>
import functools

import jax
import jax.numpy as jnp
from jax.experimental import pallas as pl
from jax.experimental.pallas import tpu as pltpu


def _round_up(x: int, m: int) -> int:
    return ((x + m - 1) // m) * m


def laser_regression_kernel(x_ref, w1_ref, b1_ref, w2_ref, b2_ref, o_ref):
    # fc1 on the MXU with f32 accumulation.
    h = jnp.dot(x_ref[...], w1_ref[...], preferred_element_type=jnp.float32)
    # Bias-add + ReLU on the f32 accumulator (VPU, f32 path on all chips).
    h = jnp.maximum(h + b1_ref[...], 0.0)
    # fc2: cast activations to the weight dtype for the MXU, accumulate in f32.
    y = jnp.dot(h.astype(w2_ref.dtype), w2_ref[...],
                preferred_element_type=jnp.float32)
    y = y + b2_ref[...]
    o_ref[...] = y.astype(o_ref.dtype)


@functools.partial(jax.jit, static_argnames=("tile_b", "compute_dtype", "out_dtype"))
def laser_regression(x, w1, b1, w2, b2, *, tile_b=512,
                     compute_dtype=jnp.bfloat16, out_dtype=jnp.float32):
    """Fused fc1 -> ReLU -> fc2.

    Streams x in (TILE_B, input_size) tiles over a 1-D batch grid while the
    (tiny) weights and biases stay VMEM-resident. TILE_B defaults to 512 rows
    (measured ~85% of HBM roofline for streamed tiles) and is clamped down for
    small batches; the batch is zero-padded to a tile multiple and the result
    is sliced back.
    """
    B, in_size = x.shape
    hidden = w1.shape[1]
    out_size = w2.shape[1]

    # MXU inputs in compute dtype; biases stay f32 (added to the f32 accumulator).
    x = x.astype(compute_dtype)
    w1 = w1.astype(compute_dtype)
    w2 = w2.astype(compute_dtype)
    b1 = b1.astype(jnp.float32)
    b2 = b2.astype(jnp.float32)

    # Batch tile: multiple of 8 (sublane), at most tile_b.
    tb = min(tile_b, _round_up(B, 8))
    b_pad = _round_up(B, tb)
    if b_pad != B:
        x = jnp.pad(x, ((0, b_pad - B), (0, 0)))
    n_tiles = b_pad // tb

    flops = 2 * b_pad * (in_size * hidden + hidden * out_size)
    bytes_accessed = (
        b_pad * in_size * jnp.dtype(compute_dtype).itemsize          # x
        + (in_size * hidden + hidden * out_size) * jnp.dtype(compute_dtype).itemsize
        + (hidden + out_size) * 4                                    # biases (f32)
        + b_pad * out_size * jnp.dtype(out_dtype).itemsize)          # out

    out = pl.pallas_call(
        laser_regression_kernel,
        out_shape=jax.ShapeDtypeStruct((b_pad, out_size), out_dtype),
        grid_spec=pltpu.PrefetchScalarGridSpec(
            num_scalar_prefetch=0,
            grid=(n_tiles,),
            in_specs=[
                pl.BlockSpec((tb, in_size), lambda i: (i, 0)),       # streamed x
                pl.BlockSpec((in_size, hidden), lambda i: (0, 0)),   # resident W1
                pl.BlockSpec((1, hidden), lambda i: (0, 0)),         # resident b1
                pl.BlockSpec((hidden, out_size), lambda i: (0, 0)),  # resident W2
                pl.BlockSpec((1, out_size), lambda i: (0, 0)),       # resident b2
            ],
            out_specs=pl.BlockSpec((tb, out_size), lambda i: (i, 0)),
        ),
        compiler_params=pltpu.CompilerParams(
            dimension_semantics=("parallel",),   # megacore sharding on v7x
        ),
        cost_estimate=pl.CostEstimate(
            flops=flops, transcendentals=0, bytes_accessed=bytes_accessed),
    )(x, w1, b1, w2, b2)
    return out[:B]


def _reference(x, w1, b1, w2, b2, compute_dtype=jnp.bfloat16):
    """Pure-JAX reference using the same compute dtype as the kernel."""
    xb = x.astype(compute_dtype)
    w1b = w1.astype(compute_dtype)
    w2b = w2.astype(compute_dtype)
    h = jnp.dot(xb, w1b, preferred_element_type=jnp.float32) + b1
    h = jnp.maximum(h, 0.0)
    return jnp.dot(h.astype(compute_dtype), w2b,
                   preferred_element_type=jnp.float32) + b2


if __name__ == "__main__":
    # Model dims consistent with LaserRegression(input_size, hidden_size, output_size).
    batch = 8
    input_size = 16
    hidden_size = 32
    output_size = 8

    key = jax.random.PRNGKey(0)
    kx, kw1, kb1, kw2, kb2 = jax.random.split(key, 5)

    x = jax.random.normal(kx, (batch, input_size), dtype=jnp.float32)

    # Deterministic parameter init (PyTorch-style uniform bounds, not a checkpoint).
    bound1 = 1.0 / (input_size ** 0.5)
    w1 = jax.random.uniform(kw1, (input_size, hidden_size), jnp.float32,
                            minval=-bound1, maxval=bound1)
    b1 = jax.random.uniform(kb1, (1, hidden_size), jnp.float32,
                            minval=-bound1, maxval=bound1)
    bound2 = 1.0 / (hidden_size ** 0.5)
    w2 = jax.random.uniform(kw2, (hidden_size, output_size), jnp.float32,
                            minval=-bound2, maxval=bound2)
    b2 = jax.random.uniform(kb2, (1, output_size), jnp.float32,
                            minval=-bound2, maxval=bound2)

    # 1) Small batch (single tile).
    out = jax.block_until_ready(laser_regression(x, w1, b1, w2, b2))
    ref = _reference(x, w1, b1, w2, b2)
    assert out.shape == (batch, output_size)
    assert jnp.allclose(out, ref, atol=1e-3, rtol=1e-3)

    # 2) Non-multiple batch with a small tile to exercise the multi-tile grid
    #    and the pad/slice path.
    batch2 = 20
    x2 = jax.random.normal(jax.random.PRNGKey(1), (batch2, input_size), jnp.float32)
    out2 = jax.block_until_ready(
        laser_regression(x2, w1, b1, w2, b2, tile_b=8))
    ref2 = _reference(x2, w1, b1, w2, b2)
    assert out2.shape == (batch2, output_size)
    assert jnp.allclose(out2, ref2, atol=1e-3, rtol=1e-3)

    print("KERNEL_OK")
</pallas_src>

<mosaic_0001>
module attributes {stable_mosaic.version = 11 : i64} {
  func.func @laser_regression_kernel(%arg0: i32, %arg1: memref<8x16xbf16, #tpu.memory_space<vmem>>, %arg2: memref<16x32xbf16, #tpu.memory_space<vmem>>, %arg3: memref<1x32xf32, #tpu.memory_space<vmem>>, %arg4: memref<32x8xbf16, #tpu.memory_space<vmem>>, %arg5: memref<1x8xf32, #tpu.memory_space<vmem>>, %arg6: memref<8x8xf32, #tpu.memory_space<vmem>>) attributes {dimension_semantics = [#tpu.dimension_semantics<parallel>], iteration_bounds = array<i64: 1>, scalar_prefetch = 0 : i64, scratch_operands = 0 : i64, tpu.core_type = #tpu.core_type<tc>, window_params = [{transform_indices = @transform_0, window_bounds = array<i64: 8, 16>}, {pipeline_mode = #tpu.pipeline_mode<synchronous>, transform_indices = @transform_1, window_bounds = array<i64: 16, 32>}, {pipeline_mode = #tpu.pipeline_mode<synchronous>, transform_indices = @transform_2, window_bounds = array<i64: 1, 32>}, {pipeline_mode = #tpu.pipeline_mode<synchronous>, transform_indices = @transform_3, window_bounds = array<i64: 32, 8>}, {pipeline_mode = #tpu.pipeline_mode<synchronous>, transform_indices = @transform_4, window_bounds = array<i64: 1, 8>}, {transform_indices = @transform_5, window_bounds = array<i64: 8, 8>}]} {
    %c0 = arith.constant 0 : index
    %c0_0 = arith.constant 0 : index
    %0 = vector.load %arg1[%c0, %c0_0] : memref<8x16xbf16, #tpu.memory_space<vmem>>, vector<8x16xbf16>
    %c0_1 = arith.constant 0 : index
    %c0_2 = arith.constant 0 : index
    %1 = vector.load %arg2[%c0_1, %c0_2] : memref<16x32xbf16, #tpu.memory_space<vmem>>, vector<16x32xbf16>
    %cst = arith.constant dense<0.000000e+00> : vector<8x32xf32>
    %2 = tpu.matmul %0, %1, %cst {dimension_numbers = #tpu.dot_dimension_numbers<[1], [0], [0], [1], [0, 0, 1, 1], [], []>} : vector<8x16xbf16>, vector<16x32xbf16>, vector<8x32xf32> -> vector<8x32xf32>
    %c0_3 = arith.constant 0 : index
    %c0_4 = arith.constant 0 : index
    %3 = vector.load %arg3[%c0_3, %c0_4] : memref<1x32xf32, #tpu.memory_space<vmem>>, vector<1x32xf32>
    %4 = vector.broadcast %3 : vector<1x32xf32> to vector<8x32xf32>
    %5 = arith.addf %2, %4 : vector<8x32xf32>
    %cst_5 = arith.constant 0.000000e+00 : f32
    %6 = vector.broadcast %cst_5 : f32 to vector<8x32xf32>
    %7 = arith.maximumf %5, %6 : vector<8x32xf32>
    %8 = arith.truncf %7 : vector<8x32xf32> to vector<8x32xbf16>
    %c0_6 = arith.constant 0 : index
    %c0_7 = arith.constant 0 : index
    %9 = vector.load %arg4[%c0_6, %c0_7] : memref<32x8xbf16, #tpu.memory_space<vmem>>, vector<32x8xbf16>
    %cst_8 = arith.constant dense<0.000000e+00> : vector<8x8xf32>
    %10 = tpu.matmul %8, %9, %cst_8 {dimension_numbers = #tpu.dot_dimension_numbers<[1], [0], [0], [1], [0, 0, 1, 1], [], []>} : vector<8x32xbf16>, vector<32x8xbf16>, vector<8x8xf32> -> vector<8x8xf32>
    %c0_9 = arith.constant 0 : index
    %c0_10 = arith.constant 0 : index
    %11 = vector.load %arg5[%c0_9, %c0_10] : memref<1x8xf32, #tpu.memory_space<vmem>>, vector<1x8xf32>
    %12 = vector.broadcast %11 : vector<1x8xf32> to vector<8x8xf32>
    %13 = arith.addf %10, %12 : vector<8x8xf32>
    %c0_11 = arith.constant 0 : index
    %c0_12 = arith.constant 0 : index
    %14 = vector.load %arg6[%c0_11, %c0_12] : memref<8x8xf32, #tpu.memory_space<vmem>>, vector<8x8xf32>
    tpu.vector_store %arg6[%c0_11, %c0_12], %13 {strides = array<i32>} : memref<8x8xf32, #tpu.memory_space<vmem>>, vector<8x8xf32>,
    return
  }
  func.func @transform_0(%arg0: i32) -> (i32, i32) {
    %c0_i32 = arith.constant 0 : i32
    %c0_i32_0 = arith.constant 0 : i32
    return %arg0, %c0_i32 : i32, i32
  }
  func.func @transform_1(%arg0: i32) -> (i32, i32) {
    %c0_i32 = arith.constant 0 : i32
    %c0_i32_0 = arith.constant 0 : i32
    %c0_i32_1 = arith.constant 0 : i32
    return %c0_i32, %c0_i32_0 : i32, i32
  }
  func.func @transform_2(%arg0: i32) -> (i32, i32) {
    %c0_i32 = arith.constant 0 : i32
    %c0_i32_0 = arith.constant 0 : i32
    %c0_i32_1 = arith.constant 0 : i32
    return %c0_i32, %c0_i32_0 : i32, i32
  }
  func.func @transform_3(%arg0: i32) -> (i32, i32) {
    %c0_i32 = arith.constant 0 : i32
    %c0_i32_0 = arith.constant 0 : i32
    %c0_i32_1 = arith.constant 0 : i32
    return %c0_i32, %c0_i32_0 : i32, i32
  }
  func.func @transform_4(%arg0: i32) -> (i32, i32) {
    %c0_i32 = arith.constant 0 : i32
    %c0_i32_0 = arith.constant 0 : i32
    %c0_i32_1 = arith.constant 0 : i32
    return %c0_i32, %c0_i32_0 : i32, i32
  }
  func.func @transform_5(%arg0: i32) -> (i32, i32) {
    %c0_i32 = arith.constant 0 : i32
    %c0_i32_0 = arith.constant 0 : i32
    return %arg0, %c0_i32 : i32, i32
  }
}

</mosaic_0001>

<llo_original>
// kernel: laser_regression.1
$region0: #{laser_regression.1}
  #allocation0 [shape = 'u32[]', space=smem, size = 0x4, offset = 0x4, fixed_abs, tag = 'smem constant byte address 0x4 - core index']
  #allocation1 [shape = 'u32[144,128]{1,0:T(1,128)}', space=vmem, size = 0x12000, scoped, tag = 'internal scratch']
  %s0 = inlined_call_operand.vmem [shape: bf16[8,16], index: 0, kind: input, shape index: {}]
  %s1 = inlined_call_operand.vmem [shape: bf16[16,32], index: 1, kind: input, shape index: {}]
  %s2 = inlined_call_operand.vmem [shape: f32[1,32], index: 2, kind: input, shape index: {}]
  %s3 = inlined_call_operand.vmem [shape: bf16[32,8], index: 3, kind: input, shape index: {}]
  %s4 = inlined_call_operand.vmem [shape: f32[1,8], index: 4, kind: input, shape index: {}]
  %s5 = inlined_call_operand.hbm [shape: f32[8,8], index: 5, kind: output, shape index: {}]
  %s6 = sld [smem:[#allocation0]]
  $region30: #{laser_regression.1} parent=0
    _
  %s8 = ssub.s32 1, %s6
  %s9 = scalar_select 0, %s8, %s6
  $region1: #{laser_regression.1} parent=0
    #allocation2 [shape = 'u8[4096]{0}', space=vmem, size = 0x1000, scoped, tag = 'output window, operand 0, single buffered']
    #allocation3 [shape = 's32[1]{0}', space=sflag, size = 0x4, scoped, tag = 'scoped memory for laser_regression.1']
    %10 = vsyncpa [#allocation3], 0
    // Predicated region
    $region2: #{laser_regression.1} parent=1 // pred_check
      _
    $region3: #{laser_regression.1} parent=1 // pred_check_branch
      %12 = sbr.rel (0) target = $region5
    $region4: #{laser_regression.1} parent=1 // pred_region
      _
    $region5: #{laser_regression.1} parent=1 // pred_fallthru
      _
    // Predicated region
    $region6: #{laser_regression.1} parent=1 // pred_check
      _
    $region7: #{laser_regression.1} parent=1 // pred_check_branch
      %14 = sbr.rel (0) target = $region9
    $region8: #{laser_regression.1} parent=1 // pred_region
      _
    $region9: #{laser_regression.1} parent=1 // pred_fallthru
      _
    // Predicated region
    $region10: #{laser_regression.1} parent=1 // pred_check
      _
    $region11: #{laser_regression.1} parent=1 // pred_check_branch
      %16 = sbr.rel (0) target = $region13
    $region12: #{laser_regression.1} parent=1 // pred_region
      _
    $region13: #{laser_regression.1} parent=1 // pred_fallthru
      _
    // Predicated region
    $region14: #{laser_regression.1} parent=1 // pred_check
      _
    $region15: #{laser_regression.1} parent=1 // pred_check_branch
      %18 = sbr.rel (0) target = $region17
    $region16: #{laser_regression.1} parent=1 // pred_region
      _
    $region17: #{laser_regression.1} parent=1 // pred_fallthru
      _
    // Predicated region
    $region18: #{laser_regression.1} parent=1 // pred_check
      _
    $region19: #{laser_regression.1} parent=1 // pred_check_branch
      %20 = sbr.rel (0) target = $region21
    $region20: #{laser_regression.1} parent=1 // pred_region
      _
    $region21: #{laser_regression.1} parent=1 // pred_fallthru
      _
    %v22 = vld [vmem:[%s0] sm:$0xf]
    %v23 = vld [vmem:[%s1] sm:$0xf]
    %v24 = vld [vmem:[%s1 + $0x4] sm:$0xf]
    %v25 = vld [vmem:[%s2] sm:$0x1]
    %v27 = vlaneseq
    %v28 = vshrl.u32 %v27, 7
    %v29 = vsub.s32 0, %v28
    %v30 = vrot.slane %v25, %v29
    %v34 = vunpack.c.l.b16 %v23
    %v35 = vunpack.c.l.b16 %v24
    %v36 = vpack.c.b16 %v35, %v34
    %vm38 = vcmask 130048
    %v40 = vsel %vm38, %v22, 0
    %42 = vmatprep.subr.bf16.mxu0 0
    %43 = vmatpush1.bf16.msra.mxu0 %v36
    %44 = vmatprep.subr.bf16.mxu0 0
    %45 = vmatpush1.bf16.msra.mxu0 0
    %46 = vmatprep.subr.bf16.mxu0 0
    %47 = vmatpush1.bf16.msra.mxu0 0
    %48 = vmatprep.subr.bf16.mxu0 0
    %49 = vmatpush1.bf16.msra.mxu0 0
    %50 = vmatprep.subr.bf16.mxu0 0
    %51 = vmatpush1.bf16.msra.mxu0 0
    %52 = vmatprep.subr.bf16.mxu0 0
    %53 = vmatpush1.bf16.msra.mxu0 0
    %54 = vmatprep.subr.bf16.mxu0 0
    %55 = vmatpush1.bf16.msra.mxu0 0
    %56 = vmatprep.subr.bf16.mxu0 0
    %57 = vmatpush1.bf16.msra.mxu0 0
    %58 = vmatprep.subr.bf16.mxu0 0
    %59 = vmatpush1.bf16.msra.mxu0 0
    %60 = vmatprep.subr.bf16.mxu0 0
    %61 = vmatpush1.bf16.msra.mxu0 0
    %62 = vmatprep.subr.bf16.mxu0 0
    %63 = vmatpush1.bf16.msra.mxu0 0
    %64 = vmatprep.subr.bf16.mxu0 0
    %65 = vmatpush1.bf16.msra.mxu0 0
    %66 = vmatprep.subr.bf16.mxu0 0
    %67 = vmatpush1.bf16.msra.mxu0 0
    %68 = vmatprep.subr.bf16.mxu0 0
    %69 = vmatpush1.bf16.msra.mxu0 0
    %70 = vmatprep.subr.bf16.mxu0 0
    %71 = vmatpush1.bf16.msra.mxu0 0
    %72 = vmatprep.subr.bf16.mxu0 0
    %73 = vmatpush1.bf16.msra.mxu0 0
    %74 = vmatprep.mubr.bf16.mxu0 0
    %75 = vmatmul.mubr.bf16.gmra.mrb[0].mxu0 %v40
    %v76 = vpop.f32.mrb[0].mxu0
    %v77 = vadd.f32 %v30, %v76
    %v78 = vpop.f32.mrb[0].mxu0
    %v79 = vpop.f32.mrb[0].mxu0
    %v80 = vpop.f32.mrb[0].mxu0
    %81 = vdwg.mxu0
    %v82 = vmax.f32 %v77, 0.0
    %v83 = vpack.c.bf16 %v82, %v82
    %v84 = vld [vmem:[%s3] sm:$0xf]
    %v85 = vld [vmem:[%s3 + $0x4] sm:$0xf]
    %v86 = vld [vmem:[%s3 + $0x8] sm:$0xf]
    %v87 = vld [vmem:[%s3 + $0xc] sm:$0xf]
    %v88 = vld [vmem:[%s4] sm:$0x1]
    %v90 = vlaneseq
    %v91 = vshrl.u32 %v90, 7
    %v92 = vsub.s32 0, %v91
    %v93 = vrot.slane %v88, %v92
    %v99 = vunpack.c.l.b16 %v84
    %v100 = vunpack.c.l.b16 %v85
    %v101 = vunpack.c.l.b16 %v86
    %v102 = vunpack.c.l.b16 %v87
    %v103 = vpack.c.b16 %v100, %v99
    %v104 = vpack.c.b16 %v102, %v101
    %vm107 = vcmask 261120
    %v109 = vsel %vm107, %v83, 0
    %111 = vmatprep.subr.bf16.mxu0 0
    %112 = vmatpush1.bf16.msra.mxu0 %v103
    %113 = vmatprep.subr.bf16.mxu0 0
    %114 = vmatpush1.bf16.msra.mxu0 %v104
    %115 = vmatprep.subr.bf16.mxu0 0
    %116 = vmatpush1.bf16.msra.mxu0 0
    %117 = vmatprep.subr.bf16.mxu0 0
    %118 = vmatpush1.bf16.msra.mxu0 0
    %119 = vmatprep.subr.bf16.mxu0 0
    %120 = vmatpush1.bf16.msra.mxu0 0
    %121 = vmatprep.subr.bf16.mxu0 0
    %122 = vmatpush1.bf16.msra.mxu0 0
    %123 = vmatprep.subr.bf16.mxu0 0
    %124 = vmatpush1.bf16.msra.mxu0 0
    %125 = vmatprep.subr.bf16.mxu0 0
    %126 = vmatpush1.bf16.msra.mxu0 0
    %127 = vmatprep.subr.bf16.mxu0 0
    %128 = vmatpush1.bf16.msra.mxu0 0
    %129 = vmatprep.subr.bf16.mxu0 0
    %130 = vmatpush1.bf16.msra.mxu0 0
    %131 = vmatprep.subr.bf16.mxu0 0
    %132 = vmatpush1.bf16.msra.mxu0 0
    %133 = vmatprep.subr.bf16.mxu0 0
    %134 = vmatpush1.bf16.msra.mxu0 0
    %135 = vmatprep.subr.bf16.mxu0 0
    %136 = vmatpush1.bf16.msra.mxu0 0
    %137 = vmatprep.subr.bf16.mxu0 0
    %138 = vmatpush1.bf16.msra.mxu0 0
    %139 = vmatprep.subr.bf16.mxu0 0
    %140 = vmatpush1.bf16.msra.mxu0 0
    %141 = vmatprep.subr.bf16.mxu0 0
    %142 = vmatpush1.bf16.msra.mxu0 0
    %143 = vmatprep.mubr.bf16.mxu0 0
    %144 = vmatmul.mubr.bf16.gmra.mrb[0].mxu0 %v109
    %v145 = vpop.f32.mrb[0].mxu0
    %v146 = vadd.f32 %v93, %v145
    %v147 = vpop.f32.mrb[0].mxu0
    %v148 = vpop.f32.mrb[0].mxu0
    %v149 = vpop.f32.mrb[0].mxu0
    %150 = vdwg.mxu0
    %vm151 = vcmask 64512
    %152 = vst.msk [vmem:[#allocation2] sm:$0xff] %vm151, %v146
    // Predicated region
    $region22: #{laser_regression.1} parent=1 // pred_check
      _
    $region23: #{laser_regression.1} parent=1 // pred_check_branch
      %154 = sbr.rel (0) target = $region25
    $region24: #{laser_regression.1} parent=1 // pred_region
      %s156 = ssub.s32 128, 128
      %157 = vsyncadd [#allocation3], %s156
      %s159 = sshll.u32 [#allocation2], 4
      %s160 = int_to_ptr.vmem [resolvable:$true] %s159
      %162 = dma.vmem_to_hbm [thread:$0]  %s160, 128, %s5, [#allocation3]
    $region25: #{laser_regression.1} parent=1 // pred_fallthru
      _
    // Predicated region
    $region26: #{laser_regression.1} parent=1 // pred_check
      _
    $region27: #{laser_regression.1} parent=1 // pred_check_branch
      %164 = sbr.rel (0) target = $region29
    $region28: #{laser_regression.1} parent=1 // pred_region
      %165 = dma.done [#allocation3], 128
    $region29: #{laser_regression.1} parent=1 // pred_fallthru
      _
    %166 = vsyncpa [#allocation3], 1

</llo_original>
